<compile_context>
chip_gen: v6e
topology: v6e:2x2x1
jax: 0.10.0
libtpu: 0.0.40
codegen_flags: <defaults>
</compile_context>

<pallas_src>
import functools
import numpy as np
import jax
import jax.numpy as jnp
from jax import lax
from jax.experimental import pallas as pl
from jax.experimental.pallas import tpu as pltpu

BN_EPS = 1e-5


def _round_up(x, m):
    return (x + m - 1) // m * m


# ---------------------------------------------------------------------------
# Pallas kernels
# ---------------------------------------------------------------------------
def _fused_kernel_single_k(with_relu):
    """Whole-K matmul tile + folded-BN scale/shift + optional ReLU epilogue."""
    def kernel(a_ref, b_ref, s_ref, t_ref, o_ref):
        y = jnp.dot(a_ref[...], b_ref[...], preferred_element_type=jnp.float32)
        y = y * s_ref[...] + t_ref[...]
        if with_relu:
            y = jnp.maximum(y, 0.0)
        o_ref[...] = y.astype(o_ref.dtype)
    return kernel


def _fused_kernel_multi_k(with_relu):
    """K-reduction grid axis with an f32 VMEM accumulator; epilogue on last step."""
    def kernel(a_ref, b_ref, s_ref, t_ref, o_ref, acc_ref):
        @pl.when(pl.program_id(2) == 0)
        def _():
            acc_ref[...] = jnp.zeros_like(acc_ref)

        acc_ref[...] += jnp.dot(a_ref[...], b_ref[...],
                                preferred_element_type=jnp.float32)

        @pl.when(pl.program_id(2) == pl.num_programs(2) - 1)
        def _():
            y = acc_ref[...] * s_ref[...] + t_ref[...]
            if with_relu:
                y = jnp.maximum(y, 0.0)
            o_ref[...] = y.astype(o_ref.dtype)
    return kernel


def fused_matmul_bn_act(A, B, scale, shift, with_relu):
    """(M,K) @ (K,N) with fused per-column scale/shift and optional ReLU.

    A and B are fed to the MXU as bf16; accumulation + epilogue are f32.
    K and N are never zero-padded (full-dim blocks or divisor tiles); M is
    padded only to the 16-row bf16 sublane granule / tile size when needed.
    """
    M, K = A.shape
    K2, N = B.shape
    assert K == K2 and scale.shape == (N,) and shift.shape == (N,)

    # ---- N axis: never pad. Lane-dense divisor tile if possible, else full-N.
    bn = N
    for cand in (512, 256, 128):
        if N % cand == 0:
            bn = cand
            break

    # ---- K axis: full-K block when it fits comfortably in VMEM (no padding);
    #      otherwise split with a divisor tile, padding only as a last resort.
    Kp = K
    if K <= 2048:
        bk = K
    else:
        bk = None
        for cand in (512, 256, 128):
            if K % cand == 0:
                bk = cand
                break
        if bk is None:
            bk = 512
            Kp = _round_up(K, bk)
    k_steps = Kp // bk

    # ---- M axis: small M -> a single tile (padded to 16 rows for bf16);
    #      large M -> fat 256/512-row tiles to amortize per-grid-step overhead.
    if M <= 512:
        Mp = _round_up(M, 16)
        bm = Mp
    else:
        bm = 512 if M >= 2048 else 256
        Mp = _round_up(M, bm)

    A16 = A.astype(jnp.bfloat16)
    B16 = B.astype(jnp.bfloat16)
    if Mp != M or Kp != K:
        A16 = jnp.pad(A16, ((0, Mp - M), (0, Kp - K)))
    if Kp != K:
        B16 = jnp.pad(B16, ((0, Kp - K), (0, 0)))
    s2 = scale.astype(jnp.float32).reshape(1, N)
    t2 = shift.astype(jnp.float32).reshape(1, N)

    cparams = pltpu.CompilerParams(
        dimension_semantics=(("parallel", "parallel") if k_steps == 1
                             else ("parallel", "parallel", "arbitrary")),
        vmem_limit_bytes=32 * 1024 * 1024,
    )

    if k_steps == 1:
        out = pl.pallas_call(
            _fused_kernel_single_k(with_relu),
            out_shape=jax.ShapeDtypeStruct((Mp, N), jnp.float32),
            grid=(Mp // bm, N // bn),
            in_specs=[
                pl.BlockSpec((bm, Kp), lambda i, j: (i, 0)),
                pl.BlockSpec((Kp, bn), lambda i, j: (0, j)),
                pl.BlockSpec((1, bn), lambda i, j: (0, j)),
                pl.BlockSpec((1, bn), lambda i, j: (0, j)),
            ],
            out_specs=pl.BlockSpec((bm, bn), lambda i, j: (i, j)),
            compiler_params=cparams,
        )(A16, B16, s2, t2)
    else:
        out = pl.pallas_call(
            _fused_kernel_multi_k(with_relu),
            out_shape=jax.ShapeDtypeStruct((Mp, N), jnp.float32),
            grid_spec=pltpu.PrefetchScalarGridSpec(
                num_scalar_prefetch=0,
                grid=(Mp // bm, N // bn, k_steps),
                in_specs=[
                    pl.BlockSpec((bm, bk), lambda i, j, k: (i, k)),
                    pl.BlockSpec((bk, bn), lambda i, j, k: (k, j)),
                    pl.BlockSpec((1, bn), lambda i, j, k: (0, j)),
                    pl.BlockSpec((1, bn), lambda i, j, k: (0, j)),
                ],
                out_specs=pl.BlockSpec((bm, bn), lambda i, j, k: (i, j)),
                scratch_shapes=[pltpu.VMEM((bm, bn), jnp.float32)],
            ),
            compiler_params=cparams,
        )(A16, B16, s2, t2)

    if Mp != M:
        out = out[:M]
    return out


# ---------------------------------------------------------------------------
# ConvBlock wrapper (im2col + fused matmul)
# ---------------------------------------------------------------------------
def im2col(x, k, stride, pad):
    """x: NHWC -> (N*Ho*Wo, k*k*C) patches, (kh, kw, c) column ordering."""
    N, H, W, C = x.shape
    if pad:
        x = jnp.pad(x, ((0, 0), (pad, pad), (pad, pad), (0, 0)))
    Ho = (H + 2 * pad - k) // stride + 1
    Wo = (W + 2 * pad - k) // stride + 1
    cols = []
    for kh in range(k):
        for kw in range(k):
            cols.append(x[:, kh:kh + stride * (Ho - 1) + 1:stride,
                          kw:kw + stride * (Wo - 1) + 1:stride, :])
    patches = jnp.concatenate(cols, axis=-1)
    return patches.reshape(N * Ho * Wo, k * k * C), Ho, Wo


def fold_bn(conv_bias, bn):
    """Fold conv bias + inference-mode BatchNorm into per-channel scale/shift."""
    scale = bn["gamma"] / jnp.sqrt(bn["var"] + BN_EPS)
    shift = bn["beta"] + (conv_bias - bn["mean"]) * scale
    return scale, shift


@functools.partial(jax.jit, static_argnames=("stride", "padding", "with_relu"))
def conv_block_forward(x_nchw, params, stride=1, padding=1, with_relu=True):
    """PyTorch ConvBlock.forward: Conv2d -> BatchNorm2d (eval) -> optional ReLU.

    x_nchw : f32 NCHW input.
    params : {"w": (kh, kw, cin, cout), "b": (cout,), "bn": {gamma,beta,mean,var}}
    """
    x = jnp.transpose(x_nchw, (0, 2, 3, 1))               # NCHW -> NHWC
    w = params["w"]
    k, _, cin, cout = w.shape
    scale, shift = fold_bn(params["b"], params["bn"])
    # im2col patches emitted directly in bf16 (halves the HBM materialization).
    A, Ho, Wo = im2col(x.astype(jnp.bfloat16), k, stride, padding)
    Wm = w.reshape(k * k * cin, cout)
    out = fused_matmul_bn_act(A, Wm, scale, shift, with_relu)
    out = out.reshape(x.shape[0], Ho, Wo, cout)
    return jnp.transpose(out, (0, 3, 1, 2))                # NHWC -> NCHW


# ---------------------------------------------------------------------------
# Parameter construction + pure-JAX reference
# ---------------------------------------------------------------------------
def make_convblock_params(key, cin, cout, k):
    k1, k2, k3, k4, k5, k6 = jax.random.split(key, 6)
    fan_in = cin * k * k
    w_oihw = jax.random.normal(k1, (cout, cin, k, k), jnp.float32) / np.sqrt(fan_in)
    b = 0.1 * jax.random.normal(k2, (cout,), jnp.float32)
    bn = {
        "gamma": 0.5 + jax.random.uniform(k3, (cout,), dtype=jnp.float32),
        "beta": 0.1 * jax.random.normal(k4, (cout,), jnp.float32),
        "mean": 0.1 * jax.random.normal(k5, (cout,), jnp.float32),
        "var": 0.5 + jax.random.uniform(k6, (cout,), dtype=jnp.float32),
    }
    # Pallas side stores weights channels-last: (kh, kw, cin, cout)
    return {"w": jnp.transpose(w_oihw, (2, 3, 1, 0)), "b": b, "bn": bn}


def reference_convblock(x_nchw, params, stride, padding, with_relu):
    """f32 reference: lax conv + bias + eval-mode BN + optional ReLU."""
    w_oihw = jnp.transpose(params["w"], (3, 2, 0, 1))
    y = lax.conv_general_dilated(
        x_nchw, w_oihw, (stride, stride),
        [(padding, padding), (padding, padding)],
        dimension_numbers=("NCHW", "OIHW", "NCHW"))
    y = y + params["b"][None, :, None, None]
    bn = params["bn"]
    s = bn["gamma"] / jnp.sqrt(bn["var"] + BN_EPS)
    y = (y - bn["mean"][None, :, None, None]) * s[None, :, None, None] \
        + bn["beta"][None, :, None, None]
    if with_relu:
        y = jnp.maximum(y, 0.0)
    return y


# ---------------------------------------------------------------------------
if __name__ == "__main__":
    root = jax.random.PRNGKey(0)
    kx, kp1, kp2 = jax.random.split(root, 3)

    # Small shapes consistent with ConvBlock: batch=2, cin=4, 16x16 spatial.
    x = jax.random.normal(kx, (2, 4, 16, 16), dtype=jnp.float32)

    # ConvBlock(4 -> 32, k=3, stride=1, pad=1, with_relu=True)
    p1 = make_convblock_params(kp1, cin=4, cout=32, k=3)
    out1 = jax.block_until_ready(
        conv_block_forward(x, p1, stride=1, padding=1, with_relu=True))
    assert out1.shape == (2, 32, 16, 16)
    ref1 = reference_convblock(x, p1, 1, 1, True)
    np.testing.assert_allclose(np.asarray(out1), np.asarray(ref1),
                               rtol=5e-2, atol=5e-2)

    # ConvBlock(32 -> 64, k=3, stride=2, pad=1, with_relu=False)
    # (exercises the no-ReLU epilogue and a strided, larger-K conv)
    p2 = make_convblock_params(kp2, cin=32, cout=64, k=3)
    out2 = jax.block_until_ready(
        conv_block_forward(out1, p2, stride=2, padding=1, with_relu=False))
    assert out2.shape == (2, 64, 8, 8)
    ref2 = reference_convblock(out1, p2, 2, 1, False)
    np.testing.assert_allclose(np.asarray(out2), np.asarray(ref2),
                               rtol=5e-2, atol=5e-2)

    assert bool(jnp.all(jnp.isfinite(out1))) and bool(jnp.all(jnp.isfinite(out2)))
    print("KERNEL_OK")
</pallas_src>

<mosaic_0001>
module attributes {stable_mosaic.version = 11 : i64} {
  func.func @kernel(%arg0: i32, %arg1: i32, %arg2: memref<512x36xbf16, #tpu.memory_space<vmem>>, %arg3: memref<36x32xbf16, #tpu.memory_space<vmem>>, %arg4: memref<1x32xf32, #tpu.memory_space<vmem>>, %arg5: memref<1x32xf32, #tpu.memory_space<vmem>>, %arg6: memref<512x32xf32, #tpu.memory_space<vmem>>) attributes {dimension_semantics = [#tpu.dimension_semantics<parallel>, #tpu.dimension_semantics<parallel>], iteration_bounds = array<i64: 1, 1>, scalar_prefetch = 0 : i64, scratch_operands = 0 : i64, tpu.core_type = #tpu.core_type<tc>, window_params = [{transform_indices = @transform_0, window_bounds = array<i64: 512, 36>}, {transform_indices = @transform_1, window_bounds = array<i64: 36, 32>}, {transform_indices = @transform_2, window_bounds = array<i64: 1, 32>}, {transform_indices = @transform_3, window_bounds = array<i64: 1, 32>}, {transform_indices = @transform_4, window_bounds = array<i64: 512, 32>}]} {
    %c0 = arith.constant 0 : index
    %c0_0 = arith.constant 0 : index
    %0 = vector.load %arg2[%c0, %c0_0] : memref<512x36xbf16, #tpu.memory_space<vmem>>, vector<512x36xbf16>
    %c0_1 = arith.constant 0 : index
    %c0_2 = arith.constant 0 : index
    %1 = vector.load %arg3[%c0_1, %c0_2] : memref<36x32xbf16, #tpu.memory_space<vmem>>, vector<36x32xbf16>
    %cst = arith.constant dense<0.000000e+00> : vector<512x32xf32>
    %2 = tpu.matmul %0, %1, %cst {dimension_numbers = #tpu.dot_dimension_numbers<[1], [0], [0], [1], [0, 0, 1, 1], [], []>} : vector<512x36xbf16>, vector<36x32xbf16>, vector<512x32xf32> -> vector<512x32xf32>
    %c0_3 = arith.constant 0 : index
    %c0_4 = arith.constant 0 : index
    %3 = vector.load %arg4[%c0_3, %c0_4] : memref<1x32xf32, #tpu.memory_space<vmem>>, vector<1x32xf32>
    %4 = vector.broadcast %3 : vector<1x32xf32> to vector<512x32xf32>
    %5 = arith.mulf %2, %4 : vector<512x32xf32>
    %c0_5 = arith.constant 0 : index
    %c0_6 = arith.constant 0 : index
    %6 = vector.load %arg5[%c0_5, %c0_6] : memref<1x32xf32, #tpu.memory_space<vmem>>, vector<1x32xf32>
    %7 = vector.broadcast %6 : vector<1x32xf32> to vector<512x32xf32>
    %8 = arith.addf %5, %7 : vector<512x32xf32>
    %cst_7 = arith.constant 0.000000e+00 : f32
    %9 = vector.broadcast %cst_7 : f32 to vector<512x32xf32>
    %10 = arith.maximumf %8, %9 : vector<512x32xf32>
    %c0_8 = arith.constant 0 : index
    %c0_9 = arith.constant 0 : index
    %11 = vector.load %arg6[%c0_8, %c0_9] : memref<512x32xf32, #tpu.memory_space<vmem>>, vector<512x32xf32>
    tpu.vector_store %arg6[%c0_8, %c0_9], %10 {strides = array<i32>} : memref<512x32xf32, #tpu.memory_space<vmem>>, vector<512x32xf32>,
    return
  }
  func.func @transform_0(%arg0: i32, %arg1: i32) -> (i32, i32) {
    %c0_i32 = arith.constant 0 : i32
    %c0_i32_0 = arith.constant 0 : i32
    return %arg0, %c0_i32 : i32, i32
  }
  func.func @transform_1(%arg0: i32, %arg1: i32) -> (i32, i32) {
    %c0_i32 = arith.constant 0 : i32
    %c0_i32_0 = arith.constant 0 : i32
    return %c0_i32, %arg1 : i32, i32
  }
  func.func @transform_2(%arg0: i32, %arg1: i32) -> (i32, i32) {
    %c0_i32 = arith.constant 0 : i32
    %c0_i32_0 = arith.constant 0 : i32
    return %c0_i32, %arg1 : i32, i32
  }
  func.func @transform_3(%arg0: i32, %arg1: i32) -> (i32, i32) {
    %c0_i32 = arith.constant 0 : i32
    %c0_i32_0 = arith.constant 0 : i32
    return %c0_i32, %arg1 : i32, i32
  }
  func.func @transform_4(%arg0: i32, %arg1: i32) -> (i32, i32) {
    %c0_i32 = arith.constant 0 : i32
    return %arg0, %arg1 : i32, i32
  }
}

</mosaic_0001>

<llo_original>
// kernel: conv_block_forward.1
$region0: #{conv_block_forward.1}
  #allocation0 [shape = 'u32[]', space=smem, size = 0x4, offset = 0x4, fixed_abs, tag = 'smem constant byte address 0x4 - core index']
  #allocation1 [shape = 'u32[144,128]{1,0:T(1,128)}', space=vmem, size = 0x12000, scoped, tag = 'internal scratch']
  %s0 = inlined_call_operand.vmem [shape: bf16[512,36], index: 0, kind: input, shape index: {}]
  %s1 = inlined_call_operand.vmem [shape: bf16[36,32], index: 1, kind: input, shape index: {}]
  %s2 = inlined_call_operand.vmem [shape: f32[1,32], index: 2, kind: input, shape index: {}]
  %s3 = inlined_call_operand.vmem [shape: f32[1,32], index: 3, kind: input, shape index: {}]
  %s4 = inlined_call_operand.hbm [shape: f32[512,32], index: 4, kind: output, shape index: {}]
  %s5 = sld [smem:[#allocation0]]
  $region26: #{conv_block_forward.1} parent=0
    _
  %s7 = ssub.s32 1, %s5
  %s8 = scalar_select 0, %s7, %s5
  $region1: #{conv_block_forward.1} parent=0
    #allocation2 [shape = 'u8[262144]{0}', space=vmem, size = 0x40000, scoped, tag = 'output window, operand 0, single buffered']
    #allocation3 [shape = 's32[1]{0}', space=sflag, size = 0x4, scoped, tag = 'scoped memory for conv_block_forward.1']
    %9 = vsyncpa [#allocation3], 0
    // Predicated region
    $region2: #{conv_block_forward.1} parent=1 // pred_check
      _
    $region3: #{conv_block_forward.1} parent=1 // pred_check_branch
      %11 = sbr.rel (0) target = $region5
    $region4: #{conv_block_forward.1} parent=1 // pred_region
      _
    $region5: #{conv_block_forward.1} parent=1 // pred_fallthru
      _
    // Predicated region
    $region6: #{conv_block_forward.1} parent=1 // pred_check
      _
    $region7: #{conv_block_forward.1} parent=1 // pred_check_branch
      %13 = sbr.rel (0) target = $region9
    $region8: #{conv_block_forward.1} parent=1 // pred_region
      _
    $region9: #{conv_block_forward.1} parent=1 // pred_fallthru
      _
    // Predicated region
    $region10: #{conv_block_forward.1} parent=1 // pred_check
      _
    $region11: #{conv_block_forward.1} parent=1 // pred_check_branch
      %15 = sbr.rel (0) target = $region13
    $region12: #{conv_block_forward.1} parent=1 // pred_region
      _
    $region13: #{conv_block_forward.1} parent=1 // pred_fallthru
      _
    // Predicated region
    $region14: #{conv_block_forward.1} parent=1 // pred_check
      _
    $region15: #{conv_block_forward.1} parent=1 // pred_check_branch
      %17 = sbr.rel (0) target = $region17
    $region16: #{conv_block_forward.1} parent=1 // pred_region
      _
    $region17: #{conv_block_forward.1} parent=1 // pred_fallthru
      _
    %v19 = vld [vmem:[%s0] sm:$0xf]
    %v20 = vld [vmem:[%s0 + $0x4] sm:$0xf]
    %v21 = vld [vmem:[%s0 + $0x8] sm:$0xf]
    %v22 = vld [vmem:[%s0 + $0xc] sm:$0xf]
    %v23 = vld [vmem:[%s0 + $0x10] sm:$0xf]
    %v24 = vld [vmem:[%s0 + $0x14] sm:$0xf]
    %v25 = vld [vmem:[%s0 + $0x18] sm:$0xf]
    %v26 = vld [vmem:[%s0 + $0x1c] sm:$0xf]
    %v27 = vld [vmem:[%s0 + $0x20] sm:$0xf]
    %v28 = vld [vmem:[%s0 + $0x24] sm:$0xf]
    %v29 = vld [vmem:[%s0 + $0x28] sm:$0xf]
    %v30 = vld [vmem:[%s0 + $0x2c] sm:$0xf]
    %v31 = vld [vmem:[%s0 + $0x30] sm:$0xf]
    %v32 = vld [vmem:[%s0 + $0x34] sm:$0xf]
    %v33 = vld [vmem:[%s0 + $0x38] sm:$0xf]
    %v34 = vld [vmem:[%s0 + $0x3c] sm:$0xf]
    %v35 = vld [vmem:[%s0 + $0x40] sm:$0xf]
    %v36 = vld [vmem:[%s0 + $0x44] sm:$0xf]
    %v37 = vld [vmem:[%s0 + $0x48] sm:$0xf]
    %v38 = vld [vmem:[%s0 + $0x4c] sm:$0xf]
    %v39 = vld [vmem:[%s0 + $0x50] sm:$0xf]
    %v40 = vld [vmem:[%s0 + $0x54] sm:$0xf]
    %v41 = vld [vmem:[%s0 + $0x58] sm:$0xf]
    %v42 = vld [vmem:[%s0 + $0x5c] sm:$0xf]
    %v43 = vld [vmem:[%s0 + $0x60] sm:$0xf]
    %v44 = vld [vmem:[%s0 + $0x64] sm:$0xf]
    %v45 = vld [vmem:[%s0 + $0x68] sm:$0xf]
    %v46 = vld [vmem:[%s0 + $0x6c] sm:$0xf]
    %v47 = vld [vmem:[%s0 + $0x70] sm:$0xf]
    %v48 = vld [vmem:[%s0 + $0x74] sm:$0xf]
    %v49 = vld [vmem:[%s0 + $0x78] sm:$0xf]
    %v50 = vld [vmem:[%s0 + $0x7c] sm:$0xf]
    %v51 = vld [vmem:[%s0 + $0x80] sm:$0xf]
    %v52 = vld [vmem:[%s0 + $0x84] sm:$0xf]
    %v53 = vld [vmem:[%s0 + $0x88] sm:$0xf]
    %v54 = vld [vmem:[%s0 + $0x8c] sm:$0xf]
    %v55 = vld [vmem:[%s0 + $0x90] sm:$0xf]
    %v56 = vld [vmem:[%s0 + $0x94] sm:$0xf]
    %v57 = vld [vmem:[%s0 + $0x98] sm:$0xf]
    %v58 = vld [vmem:[%s0 + $0x9c] sm:$0xf]
    %v59 = vld [vmem:[%s0 + $0xa0] sm:$0xf]
    %v60 = vld [vmem:[%s0 + $0xa4] sm:$0xf]
    %v61 = vld [vmem:[%s0 + $0xa8] sm:$0xf]
    %v62 = vld [vmem:[%s0 + $0xac] sm:$0xf]
    %v63 = vld [vmem:[%s0 + $0xb0] sm:$0xf]
    %v64 = vld [vmem:[%s0 + $0xb4] sm:$0xf]
    %v65 = vld [vmem:[%s0 + $0xb8] sm:$0xf]
    %v66 = vld [vmem:[%s0 + $0xbc] sm:$0xf]
    %v67 = vld [vmem:[%s0 + $0xc0] sm:$0xf]
    %v68 = vld [vmem:[%s0 + $0xc4] sm:$0xf]
    %v69 = vld [vmem:[%s0 + $0xc8] sm:$0xf]
    %v70 = vld [vmem:[%s0 + $0xcc] sm:$0xf]
    %v71 = vld [vmem:[%s0 + $0xd0] sm:$0xf]
    %v72 = vld [vmem:[%s0 + $0xd4] sm:$0xf]
    %v73 = vld [vmem:[%s0 + $0xd8] sm:$0xf]
    %v74 = vld [vmem:[%s0 + $0xdc] sm:$0xf]
    %v75 = vld [vmem:[%s0 + $0xe0] sm:$0xf]
    %v76 = vld [vmem:[%s0 + $0xe4] sm:$0xf]
    %v77 = vld [vmem:[%s0 + $0xe8] sm:$0xf]
    %v78 = vld [vmem:[%s0 + $0xec] sm:$0xf]
    %v79 = vld [vmem:[%s0 + $0xf0] sm:$0xf]
    %v80 = vld [vmem:[%s0 + $0xf4] sm:$0xf]
    %v81 = vld [vmem:[%s0 + $0xf8] sm:$0xf]
    %v82 = vld [vmem:[%s0 + $0xfc] sm:$0xf]
    %v83 = vld [vmem:[%s1] sm:$0xf]
    %v84 = vld [vmem:[%s1 + $0x4] sm:$0xf]
    %v85 = vld [vmem:[%s1 + $0x8] sm:$0xf]
    %v86 = vld [vmem:[%s1 + $0xc] sm:$0xf]
    %v87 = vld [vmem:[%s1 + $0x10] sm:$0x3]
    %v152 = vunpack.c.l.b16 %v19
    %v153 = vunpack.c.l.b16 %v20
    %v154 = vunpack.c.l.b16 %v21
    %v155 = vunpack.c.l.b16 %v22
    %v156 = vunpack.c.l.b16 %v23
    %v157 = vunpack.c.l.b16 %v24
    %v158 = vunpack.c.l.b16 %v25
    %v159 = vunpack.c.l.b16 %v26
    %v160 = vunpack.c.l.b16 %v27
    %v161 = vunpack.c.l.b16 %v28
    %v162 = vunpack.c.l.b16 %v29
    %v163 = vunpack.c.l.b16 %v30
    %v164 = vunpack.c.l.b16 %v31
    %v165 = vunpack.c.l.b16 %v32
    %v166 = vunpack.c.l.b16 %v33
    %v167 = vunpack.c.l.b16 %v34
    %v168 = vunpack.c.l.b16 %v35
    %v169 = vunpack.c.l.b16 %v36
    %v170 = vunpack.c.l.b16 %v37
    %v171 = vunpack.c.l.b16 %v38
    %v172 = vunpack.c.l.b16 %v39
    %v173 = vunpack.c.l.b16 %v40
    %v174 = vunpack.c.l.b16 %v41
    %v175 = vunpack.c.l.b16 %v42
    %v176 = vunpack.c.l.b16 %v43
    %v177 = vunpack.c.l.b16 %v44
    %v178 = vunpack.c.l.b16 %v45
    %v179 = vunpack.c.l.b16 %v46
    %v180 = vunpack.c.l.b16 %v47
    %v181 = vunpack.c.l.b16 %v48
    %v182 = vunpack.c.l.b16 %v49
    %v183 = vunpack.c.l.b16 %v50
    %v184 = vunpack.c.l.b16 %v51
    %v185 = vunpack.c.l.b16 %v52
    %v186 = vunpack.c.l.b16 %v53
    %v187 = vunpack.c.l.b16 %v54
    %v188 = vunpack.c.l.b16 %v55
    %v189 = vunpack.c.l.b16 %v56
    %v190 = vunpack.c.l.b16 %v57
    %v191 = vunpack.c.l.b16 %v58
    %v192 = vunpack.c.l.b16 %v59
    %v193 = vunpack.c.l.b16 %v60
    %v194 = vunpack.c.l.b16 %v61
    %v195 = vunpack.c.l.b16 %v62
    %v196 = vunpack.c.l.b16 %v63
    %v197 = vunpack.c.l.b16 %v64
    %v198 = vunpack.c.l.b16 %v65
    %v199 = vunpack.c.l.b16 %v66
    %v200 = vunpack.c.l.b16 %v67
    %v201 = vunpack.c.l.b16 %v68
    %v202 = vunpack.c.l.b16 %v69
    %v203 = vunpack.c.l.b16 %v70
    %v204 = vunpack.c.l.b16 %v71
    %v205 = vunpack.c.l.b16 %v72
    %v206 = vunpack.c.l.b16 %v73
    %v207 = vunpack.c.l.b16 %v74
    %v208 = vunpack.c.l.b16 %v75
    %v209 = vunpack.c.l.b16 %v76
    %v210 = vunpack.c.l.b16 %v77
    %v211 = vunpack.c.l.b16 %v78
    %v212 = vunpack.c.l.b16 %v79
    %v213 = vunpack.c.l.b16 %v80
    %v214 = vunpack.c.l.b16 %v81
    %v215 = vunpack.c.l.b16 %v82
    %v216 = vpack.c.b16 %v153, %v152
    %v217 = vpack.c.b16 %v155, %v154
    %v218 = vpack.c.b16 %v157, %v156
    %v219 = vpack.c.b16 %v159, %v158
    %v220 = vpack.c.b16 %v161, %v160
    %v221 = vpack.c.b16 %v163, %v162
    %v222 = vpack.c.b16 %v165, %v164
    %v223 = vpack.c.b16 %v167, %v166
    %v224 = vpack.c.b16 %v169, %v168
    %v225 = vpack.c.b16 %v171, %v170
    %v226 = vpack.c.b16 %v173, %v172
    %v227 = vpack.c.b16 %v175, %v174
    %v228 = vpack.c.b16 %v177, %v176
    %v229 = vpack.c.b16 %v179, %v178
    %v230 = vpack.c.b16 %v181, %v180
    %v231 = vpack.c.b16 %v183, %v182
    %v232 = vpack.c.b16 %v185, %v184
    %v233 = vpack.c.b16 %v187, %v186
    %v234 = vpack.c.b16 %v189, %v188
    %v235 = vpack.c.b16 %v191, %v190
    %v236 = vpack.c.b16 %v193, %v192
    %v237 = vpack.c.b16 %v195, %v194
    %v238 = vpack.c.b16 %v197, %v196
    %v239 = vpack.c.b16 %v199, %v198
    %v240 = vpack.c.b16 %v201, %v200
    %v241 = vpack.c.b16 %v203, %v202
    %v242 = vpack.c.b16 %v205, %v204
    %v243 = vpack.c.b16 %v207, %v206
    %v244 = vpack.c.b16 %v209, %v208
    %v245 = vpack.c.b16 %v211, %v210
    %v246 = vpack.c.b16 %v213, %v212
    %v247 = vpack.c.b16 %v215, %v214
    %v253 = vunpack.c.l.b16 %v83
    %v254 = vunpack.c.l.b16 %v84
    %v255 = vunpack.c.l.b16 %v85
    %v256 = vunpack.c.l.b16 %v86
    %v257 = vunpack.c.l.b16 %v87
    %v258 = vpack.c.b16 %v254, %v253
    %v259 = vpack.c.b16 %v256, %v255
    %v260 = vpack.c.b16 %v257, %v257
    %vm263 = vcmask 293888
    %v265 = vsel %vm263, %v216, 0
    %v268 = vsel %vm263, %v217, 0
    %v271 = vsel %vm263, %v218, 0
    %v274 = vsel %vm263, %v219, 0
    %v277 = vsel %vm263, %v220, 0
    %v280 = vsel %vm263, %v221, 0
    %v283 = vsel %vm263, %v222, 0
    %v286 = vsel %vm263, %v223, 0
    %v289 = vsel %vm263, %v224, 0
    %v292 = vsel %vm263, %v225, 0
    %v295 = vsel %vm263, %v226, 0
    %v298 = vsel %vm263, %v227, 0
    %v301 = vsel %vm263, %v228, 0
    %v304 = vsel %vm263, %v229, 0
    %v307 = vsel %vm263, %v230, 0
    %v310 = vsel %vm263, %v231, 0
    %v313 = vsel %vm263, %v232, 0
    %v316 = vsel %vm263, %v233, 0
    %v319 = vsel %vm263, %v234, 0
    %v322 = vsel %vm263, %v235, 0
    %v325 = vsel %vm263, %v236, 0
    %v328 = vsel %vm263, %v237, 0
    %v331 = vsel %vm263, %v238, 0
    %v334 = vsel %vm263, %v239, 0
    %v337 = vsel %vm263, %v240, 0
    %v340 = vsel %vm263, %v241, 0
    %v343 = vsel %vm263, %v242, 0
    %v346 = vsel %vm263, %v243, 0
    %v349 = vsel %vm263, %v244, 0
    %v352 = vsel %vm263, %v245, 0
    %v355 = vsel %vm263, %v246, 0
    %v358 = vsel %vm263, %v247, 0
    %vm360 = vcmask 1041408
    %v362 = vsel %vm360, %v260, 0
    %364 = vmatprep.subr.bf16.mxu0 0
    %365 = vmatpush1.bf16.msra.mxu0 0
    %366 = vmatprep.subr.bf16.mxu0 0
    %367 = vmatpush1.bf16.msra.mxu0 0
    %368 = vmatprep.subr.bf16.mxu0 0
    %369 = vmatpush1.bf16.msra.mxu0 0
    %370 = vmatprep.subr.bf16.mxu0 0
    %371 = vmatpush1.bf16.msra.mxu0 0
    %372 = vmatprep.subr.bf16.mxu0 0
    %373 = vmatpush1.bf16.msra.mxu0 0
    %374 = vmatprep.subr.bf16.mxu0 0
    %375 = vmatpush1.bf16.msra.mxu0 %v362
    %376 = vmatprep.subr.bf16.mxu0 0
    %377 = vmatpush1.bf16.msra.mxu0 %v259
    %378 = vmatprep.subr.bf16.mxu0 0
    %379 = vmatpush1.bf16.msra.mxu0 %v258
    %380 = vmatprep.subr.bf16.mxu0 0
    %381 = vmatpush2.bf16.msra.mxu0 0
    %382 = vmatprep.subr.bf16.mxu0 0
    %383 = vmatpush2.bf16.msra.mxu0 0
    %384 = vmatprep.subr.bf16.mxu0 0
    %385 = vmatpush2.bf16.msra.mxu0 0
    %386 = vmatprep.subr.bf16.mxu0 0
    %387 = vmatpush2.bf16.msra.mxu0 0
    %388 = vmatprep.subr.bf16.mxu0 0
    %389 = vmatpush2.bf16.msra.mxu0 0
    %390 = vmatprep.subr.bf16.mxu0 0
    %391 = vmatpush2.bf16.msra.mxu0 0
    %392 = vmatprep.subr.bf16.mxu0 0
    %393 = vmatpush2.bf16.msra.mxu0 0
    %394 = vmatprep.subr.bf16.mxu0 0
    %395 = vmatpush2.bf16.msra.mxu0 0
    %396 = vmatprep.mubr.bf16.mxu0 0
    %397 = vmatmul.mubr.bf16.gmra.mxu0 %v265
    %v398 = vpop.f32.mrf.mxu0
    %v399 = vadd.f32 0.0, %v398
    %v400 = vpop.f32.mrf.mxu0
    %v401 = vpop.f32.mrf.mxu0
    %v402 = vadd.f32 0.0, %v401
    %v403 = vpop.f32.mrf.mxu0
    %404 = vmatprep.mubr.bf16.mxu0 0
    %405 = vmatmul.mubr.bf16.gmra.mxu0 %v268
    %v406 = vpop.f32.mrf.mxu0
    %v407 = vadd.f32 0.0, %v406
    %v408 = vpop.f32.mrf.mxu0
    %v409 = vpop.f32.mrf.mxu0
    %v410 = vadd.f32 0.0, %v409
    %v411 = vpop.f32.mrf.mxu0
    %412 = vmatprep.mubr.bf16.mxu0 0
    %413 = vmatmul.mubr.bf16.gmra.mxu0 %v271
    %v414 = vpop.f32.mrf.mxu0
    %v415 = vadd.f32 0.0, %v414
    %v416 = vpop.f32.mrf.mxu0
    %v417 = vpop.f32.mrf.mxu0
    %v418 = vadd.f32 0.0, %v417
    %v419 = vpop.f32.mrf.mxu0
    %420 = vmatprep.mubr.bf16.mxu0 0
    %421 = vmatmul.mubr.bf16.gmra.mxu0 %v274
    %v422 = vpop.f32.mrf.mxu0
    %v423 = vadd.f32 0.0, %v422
    %v424 = vpop.f32.mrf.mxu0
    %v425 = vpop.f32.mrf.mxu0
    %v426 = vadd.f32 0.0, %v425
    %v427 = vpop.f32.mrf.mxu0
    %428 = vmatprep.mubr.bf16.mxu0 0
    %429 = vmatmul.mubr.bf16.gmra.mxu0 %v277
    %v430 = vpop.f32.mrf.mxu0
    %v431 = vadd.f32 0.0, %v430
    %v432 = vpop.f32.mrf.mxu0
    %v433 = vpop.f32.mrf.mxu0
    %v434 = vadd.f32 0.0, %v433
    %v435 = vpop.f32.mrf.mxu0
    %436 = vmatprep.mubr.bf16.mxu0 0
    %437 = vmatmul.mubr.bf16.gmra.mxu0 %v280
    %v438 = vpop.f32.mrf.mxu0
    %v439 = vadd.f32 0.0, %v438
    %v440 = vpop.f32.mrf.mxu0
    %v441 = vpop.f32.mrf.mxu0
    %v442 = vadd.f32 0.0, %v441
    %v443 = vpop.f32.mrf.mxu0
    %444 = vmatprep.mubr.bf16.mxu0 0
    %445 = vmatmul.mubr.bf16.gmra.mxu0 %v283
    %v446 = vpop.f32.mrf.mxu0
    %v447 = vadd.f32 0.0, %v446
    %v448 = vpop.f32.mrf.mxu0
    %v449 = vpop.f32.mrf.mxu0
    %v450 = vadd.f32 0.0, %v449
    %v451 = vpop.f32.mrf.mxu0
    %452 = vmatprep.mubr.bf16.mxu0 0
    %453 = vmatmul.mubr.bf16.gmra.mxu0 %v286
    %v454 = vpop.f32.mrf.mxu0
    %v455 = vadd.f32 0.0, %v454
    %v456 = vpop.f32.mrf.mxu0
    %v457 = vpop.f32.mrf.mxu0
    %v458 = vadd.f32 0.0, %v457
    %v459 = vpop.f32.mrf.mxu0
    %460 = vmatprep.mubr.bf16.mxu0 0
    %461 = vmatmul.mubr.bf16.gmra.mxu0 %v289
    %v462 = vpop.f32.mrf.mxu0
    %v463 = vadd.f32 0.0, %v462
    %v464 = vpop.f32.mrf.mxu0
    %v465 = vpop.f32.mrf.mxu0
    %v466 = vadd.f32 0.0, %v465
    %v467 = vpop.f32.mrf.mxu0
    %468 = vmatprep.mubr.bf16.mxu0 0
    %469 = vmatmul.mubr.bf16.gmra.mxu0 %v292
    %v470 = vpop.f32.mrf.mxu0
    %v471 = vadd.f32 0.0, %v470
    %v472 = vpop.f32.mrf.mxu0
    %v473 = vpop.f32.mrf.mxu0
    %v474 = vadd.f32 0.0, %v473
    %v475 = vpop.f32.mrf.mxu0
    %476 = vmatprep.mubr.bf16.mxu0 0
    %477 = vmatmul.mubr.bf16.gmra.mxu0 %v295
    %v478 = vpop.f32.mrf.mxu0
    %v479 = vadd.f32 0.0, %v478
    %v480 = vpop.f32.mrf.mxu0
    %v481 = vpop.f32.mrf.mxu0
    %v482 = vadd.f32 0.0, %v481
    %v483 = vpop.f32.mrf.mxu0
    %484 = vmatprep.mubr.bf16.mxu0 0
    %485 = vmatmul.mubr.bf16.gmra.mxu0 %v298
    %v486 = vpop.f32.mrf.mxu0
    %v487 = vadd.f32 0.0, %v486
    %v488 = vpop.f32.mrf.mxu0
    %v489 = vpop.f32.mrf.mxu0
    %v490 = vadd.f32 0.0, %v489
    %v491 = vpop.f32.mrf.mxu0
    %492 = vmatprep.mubr.bf16.mxu0 0
    %493 = vmatmul.mubr.bf16.gmra.mxu0 %v301
    %v494 = vpop.f32.mrf.mxu0
    %v495 = vadd.f32 0.0, %v494
    %v496 = vpop.f32.mrf.mxu0
    %v497 = vpop.f32.mrf.mxu0
    %v498 = vadd.f32 0.0, %v497
    %v499 = vpop.f32.mrf.mxu0
    %500 = vmatprep.mubr.bf16.mxu0 0
    %501 = vmatmul.mubr.bf16.gmra.mxu0 %v304
    %v502 = vpop.f32.mrf.mxu0
    %v503 = vadd.f32 0.0, %v502
    %v504 = vpop.f32.mrf.mxu0
    %v505 = vpop.f32.mrf.mxu0
    %v506 = vadd.f32 0.0, %v505
    %v507 = vpop.f32.mrf.mxu0
    %508 = vmatprep.mubr.bf16.mxu0 0
    %509 = vmatmul.mubr.bf16.gmra.mxu0 %v307
    %v510 = vpop.f32.mrf.mxu0
    %v511 = vadd.f32 0.0, %v510
    %v512 = vpop.f32.mrf.mxu0
    %v513 = vpop.f32.mrf.mxu0
    %v514 = vadd.f32 0.0, %v513
    %v515 = vpop.f32.mrf.mxu0
    %516 = vmatprep.mubr.bf16.mxu0 0
    %517 = vmatmul.mubr.bf16.gmra.mxu0 %v310
    %v518 = vpop.f32.mrf.mxu0
    %v519 = vadd.f32 0.0, %v518
    %v520 = vpop.f32.mrf.mxu0
    %v521 = vpop.f32.mrf.mxu0
    %v522 = vadd.f32 0.0, %v521
    %v523 = vpop.f32.mrf.mxu0
    %524 = vmatprep.mubr.bf16.mxu0 0
    %525 = vmatmul.mubr.bf16.gmra.mxu0 %v313
    %v526 = vpop.f32.mrf.mxu0
    %v527 = vadd.f32 0.0, %v526
    %v528 = vpop.f32.mrf.mxu0
    %v529 = vpop.f32.mrf.mxu0
    %v530 = vadd.f32 0.0, %v529
    %v531 = vpop.f32.mrf.mxu0
    %532 = vmatprep.mubr.bf16.mxu0 0
    %533 = vmatmul.mubr.bf16.gmra.mxu0 %v316
    %v534 = vpop.f32.mrf.mxu0
    %v535 = vadd.f32 0.0, %v534
    %v536 = vpop.f32.mrf.mxu0
    %v537 = vpop.f32.mrf.mxu0
    %v538 = vadd.f32 0.0, %v537
    %v539 = vpop.f32.mrf.mxu0
    %540 = vmatprep.mubr.bf16.mxu0 0
    %541 = vmatmul.mubr.bf16.gmra.mxu0 %v319
    %v542 = vpop.f32.mrf.mxu0
    %v543 = vadd.f32 0.0, %v542
    %v544 = vpop.f32.mrf.mxu0
    %v545 = vpop.f32.mrf.mxu0
    %v546 = vadd.f32 0.0, %v545
    %v547 = vpop.f32.mrf.mxu0
    %548 = vmatprep.mubr.bf16.mxu0 0
    %549 = vmatmul.mubr.bf16.gmra.mxu0 %v322
    %v550 = vpop.f32.mrf.mxu0
    %v551 = vadd.f32 0.0, %v550
    %v552 = vpop.f32.mrf.mxu0
    %v553 = vpop.f32.mrf.mxu0
    %v554 = vadd.f32 0.0, %v553
    %v555 = vpop.f32.mrf.mxu0
    %556 = vmatprep.mubr.bf16.mxu0 0
    %557 = vmatmul.mubr.bf16.gmra.mxu0 %v325
    %v558 = vpop.f32.mrf.mxu0
    %v559 = vadd.f32 0.0, %v558
    %v560 = vpop.f32.mrf.mxu0
    %v561 = vpop.f32.mrf.mxu0
    %v562 = vadd.f32 0.0, %v561
    %v563 = vpop.f32.mrf.mxu0
    %564 = vmatprep.mubr.bf16.mxu0 0
    %565 = vmatmul.mubr.bf16.gmra.mxu0 %v328
    %v566 = vpop.f32.mrf.mxu0
    %v567 = vadd.f32 0.0, %v566
    %v568 = vpop.f32.mrf.mxu0
    %v569 = vpop.f32.mrf.mxu0
    %v570 = vadd.f32 0.0, %v569
    %v571 = vpop.f32.mrf.mxu0
    %572 = vmatprep.mubr.bf16.mxu0 0
    %573 = vmatmul.mubr.bf16.gmra.mxu0 %v331
    %v574 = vpop.f32.mrf.mxu0
    %v575 = vadd.f32 0.0, %v574
    %v576 = vpop.f32.mrf.mxu0
    %v577 = vpop.f32.mrf.mxu0
    %v578 = vadd.f32 0.0, %v577
    %v579 = vpop.f32.mrf.mxu0
    %580 = vmatprep.mubr.bf16.mxu0 0
    %581 = vmatmul.mubr.bf16.gmra.mxu0 %v334
    %v582 = vpop.f32.mrf.mxu0
    %v583 = vadd.f32 0.0, %v582
    %v584 = vpop.f32.mrf.mxu0
    %v585 = vpop.f32.mrf.mxu0
    %v586 = vadd.f32 0.0, %v585
    %v587 = vpop.f32.mrf.mxu0
    %588 = vmatprep.mubr.bf16.mxu0 0
    %589 = vmatmul.mubr.bf16.gmra.mxu0 %v337
    %v590 = vpop.f32.mrf.mxu0
    %v591 = vadd.f32 0.0, %v590
    %v592 = vpop.f32.mrf.mxu0
    %v593 = vpop.f32.mrf.mxu0
    %v594 = vadd.f32 0.0, %v593
    %v595 = vpop.f32.mrf.mxu0
    %596 = vmatprep.mubr.bf16.mxu0 0
    %597 = vmatmul.mubr.bf16.gmra.mxu0 %v340
    %v598 = vpop.f32.mrf.mxu0
    %v599 = vadd.f32 0.0, %v598
    %v600 = vpop.f32.mrf.mxu0
    %v601 = vpop.f32.mrf.mxu0
    %v602 = vadd.f32 0.0, %v601
    %v603 = vpop.f32.mrf.mxu0
    %604 = vmatprep.mubr.bf16.mxu0 0
    %605 = vmatmul.mubr.bf16.gmra.mxu0 %v343
    %v606 = vpop.f32.mrf.mxu0
    %v607 = vadd.f32 0.0, %v606
    %v608 = vpop.f32.mrf.mxu0
    %v609 = vpop.f32.mrf.mxu0
    %v610 = vadd.f32 0.0, %v609
    %v611 = vpop.f32.mrf.mxu0
    %612 = vmatprep.mubr.bf16.mxu0 0
    %613 = vmatmul.mubr.bf16.gmra.mxu0 %v346
    %v614 = vpop.f32.mrf.mxu0
    %v615 = vadd.f32 0.0, %v614
    %v616 = vpop.f32.mrf.mxu0
    %v617 = vpop.f32.mrf.mxu0
    %v618 = vadd.f32 0.0, %v617
    %v619 = vpop.f32.mrf.mxu0
    %620 = vmatprep.mubr.bf16.mxu0 0
    %621 = vmatmul.mubr.bf16.gmra.mxu0 %v349
    %v622 = vpop.f32.mrf.mxu0
    %v623 = vadd.f32 0.0, %v622
    %v624 = vpop.f32.mrf.mxu0
    %v625 = vpop.f32.mrf.mxu0
    %v626 = vadd.f32 0.0, %v625
    %v627 = vpop.f32.mrf.mxu0
    %628 = vmatprep.mubr.bf16.mxu0 0
    %629 = vmatmul.mubr.bf16.gmra.mxu0 %v352
    %v630 = vpop.f32.mrf.mxu0
    %v631 = vadd.f32 0.0, %v630
    %v632 = vpop.f32.mrf.mxu0
    %v633 = vpop.f32.mrf.mxu0
    %v634 = vadd.f32 0.0, %v633
    %v635 = vpop.f32.mrf.mxu0
    %636 = vmatprep.mubr.bf16.mxu0 0
    %637 = vmatmul.mubr.bf16.gmra.mxu0 %v355
    %v638 = vpop.f32.mrf.mxu0
    %v639 = vadd.f32 0.0, %v638
    %v640 = vpop.f32.mrf.mxu0
    %v641 = vpop.f32.mrf.mxu0
    %v642 = vadd.f32 0.0, %v641
    %v643 = vpop.f32.mrf.mxu0
    %644 = vmatprep.mubr.bf16.mxu0 0
    %645 = vmatmul.mubr.bf16.gmra.mxu0 %v358
    %v646 = vpop.f32.mrf.mxu0
    %v647 = vadd.f32 0.0, %v646
    %v648 = vpop.f32.mrf.mxu0
    %v649 = vpop.f32.mrf.mxu0
    %v650 = vadd.f32 0.0, %v649
    %v651 = vpop.f32.mrf.mxu0
    %652 = vdwg.mxu0
    %v653 = vld [vmem:[%s2] sm:$0x1]
    %v655 = vlaneseq
    %v656 = vshrl.u32 %v655, 7
    %v657 = vsub.s32 0, %v656
    %v658 = vrot.slane %v653, %v657
    %v660 = vmul.f32 %v399, %v658
    %v661 = vmul.f32 %v402, %v658
    %v662 = vmul.f32 %v407, %v658
    %v663 = vmul.f32 %v410, %v658
    %v664 = vmul.f32 %v415, %v658
    %v665 = vmul.f32 %v418, %v658
    %v666 = vmul.f32 %v423, %v658
    %v667 = vmul.f32 %v426, %v658
    %v668 = vmul.f32 %v431, %v658
    %v669 = vmul.f32 %v434, %v658
    %v670 = vmul.f32 %v439, %v658
    %v671 = vmul.f32 %v442, %v658
    %v672 = vmul.f32 %v447, %v658
    %v673 = vmul.f32 %v450, %v658
    %v674 = vmul.f32 %v455, %v658
    %v675 = vmul.f32 %v458, %v658
    %v676 = vmul.f32 %v463, %v658
    %v677 = vmul.f32 %v466, %v658
    %v678 = vmul.f32 %v471, %v658
    %v679 = vmul.f32 %v474, %v658
    %v680 = vmul.f32 %v479, %v658
    %v681 = vmul.f32 %v482, %v658
    %v682 = vmul.f32 %v487, %v658
    %v683 = vmul.f32 %v490, %v658
    %v684 = vmul.f32 %v495, %v658
    %v685 = vmul.f32 %v498, %v658
    %v686 = vmul.f32 %v503, %v658
    %v687 = vmul.f32 %v506, %v658
    %v688 = vmul.f32 %v511, %v658
    %v689 = vmul.f32 %v514, %v658
    %v690 = vmul.f32 %v519, %v658
    %v691 = vmul.f32 %v522, %v658
    %v692 = vmul.f32 %v527, %v658
    %v693 = vmul.f32 %v530, %v658
    %v694 = vmul.f32 %v535, %v658
    %v695 = vmul.f32 %v538, %v658
    %v696 = vmul.f32 %v543, %v658
    %v697 = vmul.f32 %v546, %v658
    %v698 = vmul.f32 %v551, %v658
    %v699 = vmul.f32 %v554, %v658
    %v700 = vmul.f32 %v559, %v658
    %v701 = vmul.f32 %v562, %v658
    %v702 = vmul.f32 %v567, %v658
    %v703 = vmul.f32 %v570, %v658
    %v704 = vmul.f32 %v575, %v658
    %v705 = vmul.f32 %v578, %v658
    %v706 = vmul.f32 %v583, %v658
    %v707 = vmul.f32 %v586, %v658
    %v708 = vmul.f32 %v591, %v658
    %v709 = vmul.f32 %v594, %v658
    %v710 = vmul.f32 %v599, %v658
    %v711 = vmul.f32 %v602, %v658
    %v712 = vmul.f32 %v607, %v658
    %v713 = vmul.f32 %v610, %v658
    %v714 = vmul.f32 %v615, %v658
    %v715 = vmul.f32 %v618, %v658
    %v716 = vmul.f32 %v623, %v658
    %v717 = vmul.f32 %v626, %v658
    %v718 = vmul.f32 %v631, %v658
    %v719 = vmul.f32 %v634, %v658
    %v720 = vmul.f32 %v639, %v658
    %v721 = vmul.f32 %v642, %v658
    %v722 = vmul.f32 %v647, %v658
    %v723 = vmul.f32 %v650, %v658
    %v724 = vld [vmem:[%s3] sm:$0x1]
    %v726 = vlaneseq
    %v727 = vshrl.u32 %v726, 7
    %v728 = vsub.s32 0, %v727
    %v729 = vrot.slane %v724, %v728
    %v731 = vadd.f32 %v660, %v729
    %v732 = vadd.f32 %v661, %v729
    %v733 = vadd.f32 %v662, %v729
    %v734 = vadd.f32 %v663, %v729
    %v735 = vadd.f32 %v664, %v729
    %v736 = vadd.f32 %v665, %v729
    %v737 = vadd.f32 %v666, %v729
    %v738 = vadd.f32 %v667, %v729
    %v739 = vadd.f32 %v668, %v729
    %v740 = vadd.f32 %v669, %v729
    %v741 = vadd.f32 %v670, %v729
    %v742 = vadd.f32 %v671, %v729
    %v743 = vadd.f32 %v672, %v729
    %v744 = vadd.f32 %v673, %v729
    %v745 = vadd.f32 %v674, %v729
    %v746 = vadd.f32 %v675, %v729
    %v747 = vadd.f32 %v676, %v729
    %v748 = vadd.f32 %v677, %v729
    %v749 = vadd.f32 %v678, %v729
    %v750 = vadd.f32 %v679, %v729
    %v751 = vadd.f32 %v680, %v729
    %v752 = vadd.f32 %v681, %v729
    %v753 = vadd.f32 %v682, %v729
    %v754 = vadd.f32 %v683, %v729
    %v755 = vadd.f32 %v684, %v729
    %v756 = vadd.f32 %v685, %v729
    %v757 = vadd.f32 %v686, %v729
    %v758 = vadd.f32 %v687, %v729
    %v759 = vadd.f32 %v688, %v729
    %v760 = vadd.f32 %v689, %v729
    %v761 = vadd.f32 %v690, %v729
    %v762 = vadd.f32 %v691, %v729
    %v763 = vadd.f32 %v692, %v729
    %v764 = vadd.f32 %v693, %v729
    %v765 = vadd.f32 %v694, %v729
    %v766 = vadd.f32 %v695, %v729
    %v767 = vadd.f32 %v696, %v729
    %v768 = vadd.f32 %v697, %v729
    %v769 = vadd.f32 %v698, %v729
    %v770 = vadd.f32 %v699, %v729
    %v771 = vadd.f32 %v700, %v729
    %v772 = vadd.f32 %v701, %v729
    %v773 = vadd.f32 %v702, %v729
    %v774 = vadd.f32 %v703, %v729
    %v775 = vadd.f32 %v704, %v729
    %v776 = vadd.f32 %v705, %v729
    %v777 = vadd.f32 %v706, %v729
    %v778 = vadd.f32 %v707, %v729
    %v779 = vadd.f32 %v708, %v729
    %v780 = vadd.f32 %v709, %v729
    %v781 = vadd.f32 %v710, %v729
    %v782 = vadd.f32 %v711, %v729
    %v783 = vadd.f32 %v712, %v729
    %v784 = vadd.f32 %v713, %v729
    %v785 = vadd.f32 %v714, %v729
    %v786 = vadd.f32 %v715, %v729
    %v787 = vadd.f32 %v716, %v729
    %v788 = vadd.f32 %v717, %v729
    %v789 = vadd.f32 %v718, %v729
    %v790 = vadd.f32 %v719, %v729
    %v791 = vadd.f32 %v720, %v729
    %v792 = vadd.f32 %v721, %v729
    %v793 = vadd.f32 %v722, %v729
    %v794 = vadd.f32 %v723, %v729
    %v795 = vmax.f32 %v731, 0.0
    %v796 = vmax.f32 %v732, 0.0
    %v797 = vmax.f32 %v733, 0.0
    %v798 = vmax.f32 %v734, 0.0
    %v799 = vmax.f32 %v735, 0.0
    %v800 = vmax.f32 %v736, 0.0
    %v801 = vmax.f32 %v737, 0.0
    %v802 = vmax.f32 %v738, 0.0
    %v803 = vmax.f32 %v739, 0.0
    %v804 = vmax.f32 %v740, 0.0
    %v805 = vmax.f32 %v741, 0.0
    %v806 = vmax.f32 %v742, 0.0
    %v807 = vmax.f32 %v743, 0.0
    %v808 = vmax.f32 %v744, 0.0
    %v809 = vmax.f32 %v745, 0.0
    %v810 = vmax.f32 %v746, 0.0
    %v811 = vmax.f32 %v747, 0.0
    %v812 = vmax.f32 %v748, 0.0
    %v813 = vmax.f32 %v749, 0.0
    %v814 = vmax.f32 %v750, 0.0
    %v815 = vmax.f32 %v751, 0.0
    %v816 = vmax.f32 %v752, 0.0
    %v817 = vmax.f32 %v753, 0.0
    %v818 = vmax.f32 %v754, 0.0
    %v819 = vmax.f32 %v755, 0.0
    %v820 = vmax.f32 %v756, 0.0
    %v821 = vmax.f32 %v757, 0.0
    %v822 = vmax.f32 %v758, 0.0
    %v823 = vmax.f32 %v759, 0.0
    %v824 = vmax.f32 %v760, 0.0
    %v825 = vmax.f32 %v761, 0.0
    %v826 = vmax.f32 %v762, 0.0
    %v827 = vmax.f32 %v763, 0.0
    %v828 = vmax.f32 %v764, 0.0
    %v829 = vmax.f32 %v765, 0.0
    %v830 = vmax.f32 %v766, 0.0
    %v831 = vmax.f32 %v767, 0.0
    %v832 = vmax.f32 %v768, 0.0
    %v833 = vmax.f32 %v769, 0.0
    %v834 = vmax.f32 %v770, 0.0
    %v835 = vmax.f32 %v771, 0.0
    %v836 = vmax.f32 %v772, 0.0
    %v837 = vmax.f32 %v773, 0.0
    %v838 = vmax.f32 %v774, 0.0
    %v839 = vmax.f32 %v775, 0.0
    %v840 = vmax.f32 %v776, 0.0
    %v841 = vmax.f32 %v777, 0.0
    %v842 = vmax.f32 %v778, 0.0
    %v843 = vmax.f32 %v779, 0.0
    %v844 = vmax.f32 %v780, 0.0
    %v845 = vmax.f32 %v781, 0.0
    %v846 = vmax.f32 %v782, 0.0
    %v847 = vmax.f32 %v783, 0.0
    %v848 = vmax.f32 %v784, 0.0
    %v849 = vmax.f32 %v785, 0.0
    %v850 = vmax.f32 %v786, 0.0
    %v851 = vmax.f32 %v787, 0.0
    %v852 = vmax.f32 %v788, 0.0
    %v853 = vmax.f32 %v789, 0.0
    %v854 = vmax.f32 %v790, 0.0
    %v855 = vmax.f32 %v791, 0.0
    %v856 = vmax.f32 %v792, 0.0
    %v857 = vmax.f32 %v793, 0.0
    %v858 = vmax.f32 %v794, 0.0
    %vm859 = vcmask 261120
    %860 = vst.msk [vmem:[#allocation2] sm:$0xff] %vm859, %v795
    %861 = vst.msk [vmem:[#allocation2 + $0x8] sm:$0xff] %vm859, %v796
    %862 = vst.msk [vmem:[#allocation2 + $0x10] sm:$0xff] %vm859, %v797
    %863 = vst.msk [vmem:[#allocation2 + $0x18] sm:$0xff] %vm859, %v798
    %864 = vst.msk [vmem:[#allocation2 + $0x20] sm:$0xff] %vm859, %v799
    %865 = vst.msk [vmem:[#allocation2 + $0x28] sm:$0xff] %vm859, %v800
    %866 = vst.msk [vmem:[#allocation2 + $0x30] sm:$0xff] %vm859, %v801
    %867 = vst.msk [vmem:[#allocation2 + $0x38] sm:$0xff] %vm859, %v802
    %868 = vst.msk [vmem:[#allocation2 + $0x40] sm:$0xff] %vm859, %v803
    %869 = vst.msk [vmem:[#allocation2 + $0x48] sm:$0xff] %vm859, %v804
    %870 = vst.msk [vmem:[#allocation2 + $0x50] sm:$0xff] %vm859, %v805
    %871 = vst.msk [vmem:[#allocation2 + $0x58] sm:$0xff] %vm859, %v806
    %872 = vst.msk [vmem:[#allocation2 + $0x60] sm:$0xff] %vm859, %v807
    %873 = vst.msk [vmem:[#allocation2 + $0x68] sm:$0xff] %vm859, %v808
    %874 = vst.msk [vmem:[#allocation2 + $0x70] sm:$0xff] %vm859, %v809
    %875 = vst.msk [vmem:[#allocation2 + $0x78] sm:$0xff] %vm859, %v810
    %876 = vst.msk [vmem:[#allocation2 + $0x80] sm:$0xff] %vm859, %v811
    %877 = vst.msk [vmem:[#allocation2 + $0x88] sm:$0xff] %vm859, %v812
    %878 = vst.msk [vmem:[#allocation2 + $0x90] sm:$0xff] %vm859, %v813
    %879 = vst.msk [vmem:[#allocation2 + $0x98] sm:$0xff] %vm859, %v814
    %880 = vst.msk [vmem:[#allocation2 + $0xa0] sm:$0xff] %vm859, %v815
    %881 = vst.msk [vmem:[#allocation2 + $0xa8] sm:$0xff] %vm859, %v816
    %882 = vst.msk [vmem:[#allocation2 + $0xb0] sm:$0xff] %vm859, %v817
    %883 = vst.msk [vmem:[#allocation2 + $0xb8] sm:$0xff] %vm859, %v818
    %884 = vst.msk [vmem:[#allocation2 + $0xc0] sm:$0xff] %vm859, %v819
    %885 = vst.msk [vmem:[#allocation2 + $0xc8] sm:$0xff] %vm859, %v820
    %886 = vst.msk [vmem:[#allocation2 + $0xd0] sm:$0xff] %vm859, %v821
    %887 = vst.msk [vmem:[#allocation2 + $0xd8] sm:$0xff] %vm859, %v822
    %888 = vst.msk [vmem:[#allocation2 + $0xe0] sm:$0xff] %vm859, %v823
    %889 = vst.msk [vmem:[#allocation2 + $0xe8] sm:$0xff] %vm859, %v824
    %890 = vst.msk [vmem:[#allocation2 + $0xf0] sm:$0xff] %vm859, %v825
    %891 = vst.msk [vmem:[#allocation2 + $0xf8] sm:$0xff] %vm859, %v826
    %892 = vst.msk [vmem:[#allocation2 + $0x100] sm:$0xff] %vm859, %v827
    %893 = vst.msk [vmem:[#allocation2 + $0x108] sm:$0xff] %vm859, %v828
    %894 = vst.msk [vmem:[#allocation2 + $0x110] sm:$0xff] %vm859, %v829
    %895 = vst.msk [vmem:[#allocation2 + $0x118] sm:$0xff] %vm859, %v830
    %896 = vst.msk [vmem:[#allocation2 + $0x120] sm:$0xff] %vm859, %v831
    %897 = vst.msk [vmem:[#allocation2 + $0x128] sm:$0xff] %vm859, %v832
    %898 = vst.msk [vmem:[#allocation2 + $0x130] sm:$0xff] %vm859, %v833
    %899 = vst.msk [vmem:[#allocation2 + $0x138] sm:$0xff] %vm859, %v834
    %900 = vst.msk [vmem:[#allocation2 + $0x140] sm:$0xff] %vm859, %v835
    %901 = vst.msk [vmem:[#allocation2 + $0x148] sm:$0xff] %vm859, %v836
    %902 = vst.msk [vmem:[#allocation2 + $0x150] sm:$0xff] %vm859, %v837
    %903 = vst.msk [vmem:[#allocation2 + $0x158] sm:$0xff] %vm859, %v838
    %904 = vst.msk [vmem:[#allocation2 + $0x160] sm:$0xff] %vm859, %v839
    %905 = vst.msk [vmem:[#allocation2 + $0x168] sm:$0xff] %vm859, %v840
    %906 = vst.msk [vmem:[#allocation2 + $0x170] sm:$0xff] %vm859, %v841
    %907 = vst.msk [vmem:[#allocation2 + $0x178] sm:$0xff] %vm859, %v842
    %908 = vst.msk [vmem:[#allocation2 + $0x180] sm:$0xff] %vm859, %v843
    %909 = vst.msk [vmem:[#allocation2 + $0x188] sm:$0xff] %vm859, %v844
    %910 = vst.msk [vmem:[#allocation2 + $0x190] sm:$0xff] %vm859, %v845
    %911 = vst.msk [vmem:[#allocation2 + $0x198] sm:$0xff] %vm859, %v846
    %912 = vst.msk [vmem:[#allocation2 + $0x1a0] sm:$0xff] %vm859, %v847
    %913 = vst.msk [vmem:[#allocation2 + $0x1a8] sm:$0xff] %vm859, %v848
    %914 = vst.msk [vmem:[#allocation2 + $0x1b0] sm:$0xff] %vm859, %v849
    %915 = vst.msk [vmem:[#allocation2 + $0x1b8] sm:$0xff] %vm859, %v850
    %916 = vst.msk [vmem:[#allocation2 + $0x1c0] sm:$0xff] %vm859, %v851
    %917 = vst.msk [vmem:[#allocation2 + $0x1c8] sm:$0xff] %vm859, %v852
    %918 = vst.msk [vmem:[#allocation2 + $0x1d0] sm:$0xff] %vm859, %v853
    %919 = vst.msk [vmem:[#allocation2 + $0x1d8] sm:$0xff] %vm859, %v854
    %920 = vst.msk [vmem:[#allocation2 + $0x1e0] sm:$0xff] %vm859, %v855
    %921 = vst.msk [vmem:[#allocation2 + $0x1e8] sm:$0xff] %vm859, %v856
    %922 = vst.msk [vmem:[#allocation2 + $0x1f0] sm:$0xff] %vm859, %v857
    %923 = vst.msk [vmem:[#allocation2 + $0x1f8] sm:$0xff] %vm859, %v858
    // Predicated region
    $region18: #{conv_block_forward.1} parent=1 // pred_check
      _
    $region19: #{conv_block_forward.1} parent=1 // pred_check_branch
      %925 = sbr.rel (0) target = $region21
    $region20: #{conv_block_forward.1} parent=1 // pred_region
      %s927 = ssub.s32 8192, 8192
      %928 = vsyncadd [#allocation3], %s927
      %s929 = sshll.u32 [#allocation2], 4
      %s930 = int_to_ptr.vmem [resolvable:$true] %s929
      %935 = dma.vmem_to_hbm [thread:$0]  %s930, 8192, %s4, [#allocation3], 128, 128, 8
    $region21: #{conv_block_forward.1} parent=1 // pred_fallthru
      _
    // Predicated region
    $region22: #{conv_block_forward.1} parent=1 // pred_check
      _
    $region23: #{conv_block_forward.1} parent=1 // pred_check_branch
      %937 = sbr.rel (0) target = $region25
    $region24: #{conv_block_forward.1} parent=1 // pred_region
      %938 = dma.done [#allocation3], 8192
    $region25: #{conv_block_forward.1} parent=1 // pred_fallthru
      _
    %939 = vsyncpa [#allocation3], 1

</llo_original>
